<compile_context>
chip_gen: v6e
topology: v6e:2x2x1
jax: 0.10.0
libtpu: 0.0.40
codegen_flags: <defaults>
</compile_context>

<pallas_src>
import functools

import jax
import jax.numpy as jnp
from jax.experimental import pallas as pl
from jax.experimental.pallas import tpu as pltpu


def _round_up(n, m):
    return ((n + m - 1) // m) * m


# ---------------------------------------------------------------------------
# Kernels (shape-agnostic: used for both the lane-packed and fallback paths).
# ---------------------------------------------------------------------------
def _fcvpnn_kernel_full(x_ref, wx1_ref, w1_ref, b1_ref, w2_ref, b2_ref,
                        x_out_ref, x1_out_ref):
    x1 = jnp.dot(x_ref[...], wx1_ref[...], preferred_element_type=jnp.float32)
    h = jnp.dot(x1, w1_ref[...], preferred_element_type=jnp.float32) + b1_ref[...]
    h = jnp.maximum(h, 0.0)
    y = jnp.dot(h, w2_ref[...], preferred_element_type=jnp.float32) + b2_ref[...]
    x_out_ref[...] = x1 + y
    x1_out_ref[...] = x1


def _fcvpnn_kernel_est(x_ref, wx1_ref, x1_out_ref):
    # estimation=True path: only x1 is needed -> skip the MLP and the second
    # HBM output stream entirely.
    x1_out_ref[...] = jnp.dot(x_ref[...], wx1_ref[...],
                              preferred_element_type=jnp.float32)


# ---------------------------------------------------------------------------
# Launch helper.
# ---------------------------------------------------------------------------
def _pick_tile(rows, block_rows):
    """Batch-tile (sublane) size: multiple of 8, capped at block_rows, and
    aiming for >= 2 grid steps so ("parallel",) splits across v7x's 2 TCs."""
    if rows <= 8:
        return rows                      # full-extent block (== array dim)
    target = min(block_rows, pl.cdiv(rows, 2))
    return max(8, _round_up(target, 8))


def _launch(x2d, w_x1, w1_t, b1, w2_t, b2, *, block_rows, estimation):
    R, c_in = x2d.shape
    t_dim = w_x1.shape[1]
    tb = _pick_tile(R, block_rows)
    grid = (pl.cdiv(R, tb),)             # ragged last block: no pad, no slice

    batch_map = lambda i: (i, 0)
    resident = lambda i: (0, 0)          # weights stay VMEM-resident

    cparams = pltpu.CompilerParams(
        dimension_semantics=("parallel",),     # megacore split on v7x
        vmem_limit_bytes=32 * 1024 * 1024,     # safe on v5e/v6e/v7x
    )

    if estimation:
        cost = pl.CostEstimate(
            flops=2 * R * c_in * t_dim,
            transcendentals=0,
            bytes_accessed=4 * (R * (c_in + t_dim) + c_in * t_dim))
        return pl.pallas_call(
            _fcvpnn_kernel_est,
            grid=grid,
            in_specs=[pl.BlockSpec((tb, c_in), batch_map),
                      pl.BlockSpec((c_in, t_dim), resident)],
            out_specs=pl.BlockSpec((tb, t_dim), batch_map),
            out_shape=jax.ShapeDtypeStruct((R, t_dim), jnp.float32),
            compiler_params=cparams,
            cost_estimate=cost,
        )(x2d, w_x1)

    h_dim = w1_t.shape[1]
    o_dim = w2_t.shape[1]
    cost = pl.CostEstimate(
        flops=2 * R * (c_in * t_dim + t_dim * h_dim + h_dim * o_dim),
        transcendentals=0,
        bytes_accessed=4 * (R * (c_in + t_dim + o_dim)
                            + c_in * t_dim + t_dim * h_dim + h_dim
                            + h_dim * o_dim + o_dim))
    x_out, x1_out = pl.pallas_call(
        _fcvpnn_kernel_full,
        grid=grid,
        in_specs=[
            pl.BlockSpec((tb, c_in), batch_map),
            pl.BlockSpec((c_in, t_dim), resident),
            pl.BlockSpec((t_dim, h_dim), resident),
            pl.BlockSpec((1, h_dim), resident),
            pl.BlockSpec((h_dim, o_dim), resident),
            pl.BlockSpec((1, o_dim), resident),
        ],
        out_specs=(
            pl.BlockSpec((tb, o_dim), batch_map),
            pl.BlockSpec((tb, t_dim), batch_map),
        ),
        out_shape=(
            jax.ShapeDtypeStruct((R, o_dim), jnp.float32),
            jax.ShapeDtypeStruct((R, t_dim), jnp.float32),
        ),
        compiler_params=cparams,
        cost_estimate=cost,
    )(x2d, w_x1, w1_t, b1, w2_t, b2)
    return x_out, x1_out


# ---------------------------------------------------------------------------
# Public wrapper: lane-packed fast path + unpacked fallback.
# ---------------------------------------------------------------------------
def fcvpnn_pallas(x, params, *, estimation=False,
                  block_rows_packed=1024, block_rows_unpacked=4096):
    """Fused FCVPNN forward. x: (B, L) f32. Returns (x_out, x1), each (B, 24),
    or x1 only when estimation=True."""
    B, L = x.shape
    t_dim = params["w_x1"].shape[1]                       # 24
    pack = params["w_x1_p"].shape[0] // params["w_x1"].shape[0]  # static (16)

    if B >= pack and B % pack == 0 and (L * pack) % 128 == 0:
        # Lane-packed fast path: free row-major reshape + block-diagonal
        # kron(I_pack, W) weights -> all lane dims are multiples of 128.
        xp = x.reshape(B // pack, L * pack)
        if estimation:
            x1p = _launch(xp, params["w_x1_p"], None, None, None, None,
                          block_rows=block_rows_packed, estimation=True)
            return x1p.reshape(B, t_dim)
        xo_p, x1p = _launch(xp, params["w_x1_p"], params["w1_t_p"],
                            params["b1_p"], params["w2_t_p"], params["b2_p"],
                            block_rows=block_rows_packed, estimation=False)
        return xo_p.reshape(B, t_dim), x1p.reshape(B, t_dim)

    # Fallback (B not a multiple of `pack`): unpacked features, ragged grid,
    # still no pad / output-slice HBM round trips.
    if estimation:
        return _launch(x, params["w_x1"], None, None, None, None,
                       block_rows=block_rows_unpacked, estimation=True)
    return _launch(x, params["w_x1"], params["w1_t"], params["b1"],
                   params["w2_t"], params["b2"],
                   block_rows=block_rows_unpacked, estimation=False)


# ---------------------------------------------------------------------------
# Parameter setup (all constant-matrix folding + lane-packing happens once).
# ---------------------------------------------------------------------------
def init_params(seq_len=16, n_coeffs=6, pack=16, seed=0):
    key = jax.random.PRNGKey(seed)
    k1, k2, k3, k4 = jax.random.split(key, 4)

    # VPLayer function system: fixed cosine basis Phi (seq_len, n_coeffs).
    t = (jnp.arange(seq_len, dtype=jnp.float32) + 0.5) / seq_len
    k = jnp.arange(n_coeffs, dtype=jnp.float32)
    phi = jnp.cos(jnp.pi * t[:, None] * k[None, :])            # (L, K)

    # Least-squares projector computed once: coeffs = x @ pinv(Phi).T.
    proj = jnp.linalg.pinv(phi).T                              # (L, K)

    # TODO(synk): Trajectory_IDE definition not provided; approximated as a
    # fixed deterministic linear readout coeffs (K) -> 24 trajectory features.
    traj_w = (jnp.sin(jnp.arange(n_coeffs * 24, dtype=jnp.float32))
              .reshape(n_coeffs, 24) * 0.5)                    # (K, 24)

    # Fold the constant chain: x1 = (x @ proj) @ traj_w = x @ w_x1.
    w_x1 = proj @ traj_w                                       # (L, 24)

    # fc1: Linear(24, 48); fc2: Linear(48, 24). PyTorch default init.
    lim1 = 1.0 / jnp.sqrt(24.0)
    w1 = jax.random.uniform(k1, (48, 24), jnp.float32, -lim1, lim1)
    b1 = jax.random.uniform(k2, (48,), jnp.float32, -lim1, lim1)
    lim2 = 1.0 / jnp.sqrt(48.0)
    w2 = jax.random.uniform(k3, (24, 48), jnp.float32, -lim2, lim2)
    b2 = jax.random.uniform(k4, (24,), jnp.float32, -lim2, lim2)

    w1_t, w2_t = w1.T, w2.T
    b1r, b2r = b1.reshape(1, 48), b2.reshape(1, 24)

    # Lane-packed (block-diagonal) constants for the 128-lane-dense fast path.
    eye = jnp.eye(pack, dtype=jnp.float32)
    return {
        "w_x1": w_x1,                    # (L, 24)   folded VP + trajectory
        "w1_t": w1_t,                    # (24, 48)
        "b1": b1r,                       # (1, 48)
        "w2_t": w2_t,                    # (48, 24)
        "b2": b2r,                       # (1, 24)
        "w_x1_p": jnp.kron(eye, w_x1),   # (L*16, 24*16)  = (256, 384)
        "w1_t_p": jnp.kron(eye, w1_t),   # (384, 768)
        "b1_p": jnp.tile(b1r, (1, pack)),  # (1, 768)
        "w2_t_p": jnp.kron(eye, w2_t),   # (768, 384)
        "b2_p": jnp.tile(b2r, (1, pack)),  # (1, 384)
    }


@functools.partial(jax.jit, static_argnames=("estimation",))
def fcvpnn_forward(input_x, params, estimation=False):
    return fcvpnn_pallas(input_x, params, estimation=estimation)


# Pure-JAX reference (no Pallas) for correctness checking only.
def _fcvpnn_reference(input_x, params):
    x1 = input_x @ params["w_x1"]
    h = jnp.maximum(x1 @ params["w1_t"] + params["b1"], 0.0)
    y = h @ params["w2_t"] + params["b2"]
    return x1 + y, x1


if __name__ == "__main__":
    SEQ_LEN, N_COEFFS = 16, 6
    params = init_params(seq_len=SEQ_LEN, n_coeffs=N_COEFFS, seed=0)
    tol = dict(atol=1e-3, rtol=1e-3)

    # 1) Tiny batch (B=2): unpacked fallback, full-extent block.
    x_small = jax.random.normal(jax.random.PRNGKey(0), (2, SEQ_LEN), jnp.float32)
    x, x1 = fcvpnn_forward(x_small, params)
    jax.block_until_ready((x, x1))
    rx, rx1 = _fcvpnn_reference(x_small, params)
    assert x.shape == (2, 24) and x1.shape == (2, 24)
    assert jnp.all(jnp.isfinite(x)) and jnp.all(jnp.isfinite(x1))
    assert jnp.allclose(x, rx, **tol) and jnp.allclose(x1, rx1, **tol)

    x1_only = fcvpnn_forward(x_small, params, estimation=True)
    jax.block_until_ready(x1_only)
    assert x1_only.shape == (2, 24)
    assert jnp.allclose(x1_only, rx1, **tol)

    # 2) B=260: unpacked path with a ragged last grid block (no pad/slice).
    xb = jax.random.normal(jax.random.PRNGKey(1), (260, SEQ_LEN), jnp.float32)
    bx, bx1 = fcvpnn_forward(xb, params)
    jax.block_until_ready((bx, bx1))
    rbx, rbx1 = _fcvpnn_reference(xb, params)
    assert jnp.allclose(bx, rbx, **tol) and jnp.allclose(bx1, rbx1, **tol)

    # 3) B=4096: lane-packed fast path, even 2-step grid.
    xc = jax.random.normal(jax.random.PRNGKey(2), (4096, SEQ_LEN), jnp.float32)
    cx, cx1 = fcvpnn_forward(xc, params)
    jax.block_until_ready((cx, cx1))
    rcx, rcx1 = _fcvpnn_reference(xc, params)
    assert jnp.allclose(cx, rcx, **tol) and jnp.allclose(cx1, rcx1, **tol)

    cx1_only = fcvpnn_forward(xc, params, estimation=True)
    jax.block_until_ready(cx1_only)
    assert jnp.allclose(cx1_only, rcx1, **tol)

    # 4) B=1600: lane-packed path with a ragged last grid block.
    xd = jax.random.normal(jax.random.PRNGKey(3), (1600, SEQ_LEN), jnp.float32)
    dx, dx1 = fcvpnn_forward(xd, params)
    jax.block_until_ready((dx, dx1))
    rdx, rdx1 = _fcvpnn_reference(xd, params)
    assert jnp.allclose(dx, rdx, **tol) and jnp.allclose(dx1, rdx1, **tol)

    print("KERNEL_OK")
</pallas_src>

<mosaic_0001>
module attributes {stable_mosaic.version = 11 : i64} {
  func.func @_fcvpnn_kernel_full(%arg0: i32, %arg1: memref<2x16xf32, #tpu.memory_space<vmem>>, %arg2: memref<16x24xf32, #tpu.memory_space<vmem>>, %arg3: memref<24x48xf32, #tpu.memory_space<vmem>>, %arg4: memref<1x48xf32, #tpu.memory_space<vmem>>, %arg5: memref<48x24xf32, #tpu.memory_space<vmem>>, %arg6: memref<1x24xf32, #tpu.memory_space<vmem>>, %arg7: memref<2x24xf32, #tpu.memory_space<vmem>>, %arg8: memref<2x24xf32, #tpu.memory_space<vmem>>) attributes {dimension_semantics = [#tpu.dimension_semantics<parallel>], iteration_bounds = array<i64: 1>, scalar_prefetch = 0 : i64, scratch_operands = 0 : i64, tpu.core_type = #tpu.core_type<tc>, window_params = [{transform_indices = @transform_0, window_bounds = array<i64: 2, 16>}, {pipeline_mode = #tpu.pipeline_mode<synchronous>, transform_indices = @transform_1, window_bounds = array<i64: 16, 24>}, {pipeline_mode = #tpu.pipeline_mode<synchronous>, transform_indices = @transform_2, window_bounds = array<i64: 24, 48>}, {pipeline_mode = #tpu.pipeline_mode<synchronous>, transform_indices = @transform_3, window_bounds = array<i64: 1, 48>}, {pipeline_mode = #tpu.pipeline_mode<synchronous>, transform_indices = @transform_4, window_bounds = array<i64: 48, 24>}, {pipeline_mode = #tpu.pipeline_mode<synchronous>, transform_indices = @transform_5, window_bounds = array<i64: 1, 24>}, {transform_indices = @transform_6, window_bounds = array<i64: 2, 24>}, {transform_indices = @transform_7, window_bounds = array<i64: 2, 24>}]} {
    %c0 = arith.constant 0 : index
    %c0_0 = arith.constant 0 : index
    %0 = vector.load %arg1[%c0, %c0_0] : memref<2x16xf32, #tpu.memory_space<vmem>>, vector<2x16xf32>
    %c0_1 = arith.constant 0 : index
    %c0_2 = arith.constant 0 : index
    %1 = vector.load %arg2[%c0_1, %c0_2] : memref<16x24xf32, #tpu.memory_space<vmem>>, vector<16x24xf32>
    %cst = arith.constant dense<0.000000e+00> : vector<2x24xf32>
    %2 = tpu.matmul %0, %1, %cst {dimension_numbers = #tpu.dot_dimension_numbers<[1], [0], [0], [1], [0, 0, 1, 1], [], []>} : vector<2x16xf32>, vector<16x24xf32>, vector<2x24xf32> -> vector<2x24xf32>
    %c0_3 = arith.constant 0 : index
    %c0_4 = arith.constant 0 : index
    %3 = vector.load %arg3[%c0_3, %c0_4] : memref<24x48xf32, #tpu.memory_space<vmem>>, vector<24x48xf32>
    %cst_5 = arith.constant dense<0.000000e+00> : vector<2x48xf32>
    %4 = tpu.matmul %2, %3, %cst_5 {dimension_numbers = #tpu.dot_dimension_numbers<[1], [0], [0], [1], [0, 0, 1, 1], [], []>} : vector<2x24xf32>, vector<24x48xf32>, vector<2x48xf32> -> vector<2x48xf32>
    %c0_6 = arith.constant 0 : index
    %c0_7 = arith.constant 0 : index
    %5 = vector.load %arg4[%c0_6, %c0_7] : memref<1x48xf32, #tpu.memory_space<vmem>>, vector<1x48xf32>
    %6 = vector.broadcast %5 : vector<1x48xf32> to vector<2x48xf32>
    %7 = arith.addf %4, %6 : vector<2x48xf32>
    %cst_8 = arith.constant 0.000000e+00 : f32
    %8 = vector.broadcast %cst_8 : f32 to vector<2x48xf32>
    %9 = arith.maximumf %7, %8 : vector<2x48xf32>
    %c0_9 = arith.constant 0 : index
    %c0_10 = arith.constant 0 : index
    %10 = vector.load %arg5[%c0_9, %c0_10] : memref<48x24xf32, #tpu.memory_space<vmem>>, vector<48x24xf32>
    %cst_11 = arith.constant dense<0.000000e+00> : vector<2x24xf32>
    %11 = tpu.matmul %9, %10, %cst_11 {dimension_numbers = #tpu.dot_dimension_numbers<[1], [0], [0], [1], [0, 0, 1, 1], [], []>} : vector<2x48xf32>, vector<48x24xf32>, vector<2x24xf32> -> vector<2x24xf32>
    %c0_12 = arith.constant 0 : index
    %c0_13 = arith.constant 0 : index
    %12 = vector.load %arg6[%c0_12, %c0_13] : memref<1x24xf32, #tpu.memory_space<vmem>>, vector<1x24xf32>
    %13 = vector.broadcast %12 : vector<1x24xf32> to vector<2x24xf32>
    %14 = arith.addf %11, %13 : vector<2x24xf32>
    %15 = arith.addf %2, %14 : vector<2x24xf32>
    %c0_14 = arith.constant 0 : index
    %c0_15 = arith.constant 0 : index
    %16 = vector.load %arg7[%c0_14, %c0_15] : memref<2x24xf32, #tpu.memory_space<vmem>>, vector<2x24xf32>
    tpu.vector_store %arg7[%c0_14, %c0_15], %15 {strides = array<i32>} : memref<2x24xf32, #tpu.memory_space<vmem>>, vector<2x24xf32>,
    %c0_16 = arith.constant 0 : index
    %c0_17 = arith.constant 0 : index
    %17 = vector.load %arg8[%c0_16, %c0_17] : memref<2x24xf32, #tpu.memory_space<vmem>>, vector<2x24xf32>
    tpu.vector_store %arg8[%c0_16, %c0_17], %2 {strides = array<i32>} : memref<2x24xf32, #tpu.memory_space<vmem>>, vector<2x24xf32>,
    return
  }
  func.func @transform_0(%arg0: i32) -> (i32, i32) {
    %c0_i32 = arith.constant 0 : i32
    %c0_i32_0 = arith.constant 0 : i32
    return %arg0, %c0_i32 : i32, i32
  }
  func.func @transform_1(%arg0: i32) -> (i32, i32) {
    %c0_i32 = arith.constant 0 : i32
    %c0_i32_0 = arith.constant 0 : i32
    %c0_i32_1 = arith.constant 0 : i32
    return %c0_i32, %c0_i32_0 : i32, i32
  }
  func.func @transform_2(%arg0: i32) -> (i32, i32) {
    %c0_i32 = arith.constant 0 : i32
    %c0_i32_0 = arith.constant 0 : i32
    %c0_i32_1 = arith.constant 0 : i32
    return %c0_i32, %c0_i32_0 : i32, i32
  }
  func.func @transform_3(%arg0: i32) -> (i32, i32) {
    %c0_i32 = arith.constant 0 : i32
    %c0_i32_0 = arith.constant 0 : i32
    %c0_i32_1 = arith.constant 0 : i32
    return %c0_i32, %c0_i32_0 : i32, i32
  }
  func.func @transform_4(%arg0: i32) -> (i32, i32) {
    %c0_i32 = arith.constant 0 : i32
    %c0_i32_0 = arith.constant 0 : i32
    %c0_i32_1 = arith.constant 0 : i32
    return %c0_i32, %c0_i32_0 : i32, i32
  }
  func.func @transform_5(%arg0: i32) -> (i32, i32) {
    %c0_i32 = arith.constant 0 : i32
    %c0_i32_0 = arith.constant 0 : i32
    %c0_i32_1 = arith.constant 0 : i32
    return %c0_i32, %c0_i32_0 : i32, i32
  }
  func.func @transform_6(%arg0: i32) -> (i32, i32) {
    %c0_i32 = arith.constant 0 : i32
    %c0_i32_0 = arith.constant 0 : i32
    return %arg0, %c0_i32 : i32, i32
  }
  func.func @transform_7(%arg0: i32) -> (i32, i32) {
    %c0_i32 = arith.constant 0 : i32
    %c0_i32_0 = arith.constant 0 : i32
    return %arg0, %c0_i32 : i32, i32
  }
}

</mosaic_0001>

<llo_original>
// kernel: fcvpnn_forward.1
$region0: #{fcvpnn_forward.1}
  #allocation0 [shape = 'u32[]', space=smem, size = 0x4, offset = 0x4, fixed_abs, tag = 'smem constant byte address 0x4 - core index']
  #allocation1 [shape = 'u32[144,128]{1,0:T(1,128)}', space=vmem, size = 0x12000, scoped, tag = 'internal scratch']
  %s0 = inlined_call_operand.vmem [shape: f32[2,16], index: 0, kind: input, shape index: {}]
  %s1 = inlined_call_operand.vmem [shape: f32[16,24], index: 1, kind: input, shape index: {}]
  %s2 = inlined_call_operand.vmem [shape: f32[24,48], index: 2, kind: input, shape index: {}]
  %s3 = inlined_call_operand.vmem [shape: f32[1,48], index: 3, kind: input, shape index: {}]
  %s4 = inlined_call_operand.vmem [shape: f32[48,24], index: 4, kind: input, shape index: {}]
  %s5 = inlined_call_operand.vmem [shape: f32[1,24], index: 5, kind: input, shape index: {}]
  %s6 = inlined_call_operand.hbm [shape: f32[2,24], index: 6, kind: output, shape index: {0}]
  %s7 = inlined_call_operand.hbm [shape: f32[2,24], index: 7, kind: output, shape index: {1}]
  %8 = xla_tuple %s6, %s7
  %s9 = sld [smem:[#allocation0]]
  $region42: #{fcvpnn_forward.1} parent=0
    _
  %s11 = ssub.s32 1, %s9
  %s12 = scalar_select 0, %s11, %s9
  $region1: #{fcvpnn_forward.1} parent=0
    #allocation2 [shape = 'u8[1024]{0}', space=vmem, size = 0x400, scoped, tag = 'output window, operand 0, single buffered']
    #allocation3 [shape = 's32[1]{0}', space=sflag, size = 0x4, scoped, tag = 'scoped memory for fcvpnn_forward.1']
    #allocation4 [shape = 'u8[1024]{0}', space=vmem, size = 0x400, scoped, tag = 'output window, operand 1, single buffered']
    #allocation5 [shape = 's32[1]{0}', space=sflag, size = 0x4, scoped, tag = 'scoped memory for fcvpnn_forward.1']
    %13 = vsyncpa [#allocation3], 0
    %14 = vsyncpa [#allocation5], 0
    // Predicated region
    $region2: #{fcvpnn_forward.1} parent=1 // pred_check
      _
    $region3: #{fcvpnn_forward.1} parent=1 // pred_check_branch
      %16 = sbr.rel (0) target = $region5
    $region4: #{fcvpnn_forward.1} parent=1 // pred_region
      _
    $region5: #{fcvpnn_forward.1} parent=1 // pred_fallthru
      _
    // Predicated region
    $region6: #{fcvpnn_forward.1} parent=1 // pred_check
      _
    $region7: #{fcvpnn_forward.1} parent=1 // pred_check_branch
      %18 = sbr.rel (0) target = $region9
    $region8: #{fcvpnn_forward.1} parent=1 // pred_region
      _
    $region9: #{fcvpnn_forward.1} parent=1 // pred_fallthru
      _
    // Predicated region
    $region10: #{fcvpnn_forward.1} parent=1 // pred_check
      _
    $region11: #{fcvpnn_forward.1} parent=1 // pred_check_branch
      %20 = sbr.rel (0) target = $region13
    $region12: #{fcvpnn_forward.1} parent=1 // pred_region
      _
    $region13: #{fcvpnn_forward.1} parent=1 // pred_fallthru
      _
    // Predicated region
    $region14: #{fcvpnn_forward.1} parent=1 // pred_check
      _
    $region15: #{fcvpnn_forward.1} parent=1 // pred_check_branch
      %22 = sbr.rel (0) target = $region17
    $region16: #{fcvpnn_forward.1} parent=1 // pred_region
      _
    $region17: #{fcvpnn_forward.1} parent=1 // pred_fallthru
      _
    // Predicated region
    $region18: #{fcvpnn_forward.1} parent=1 // pred_check
      _
    $region19: #{fcvpnn_forward.1} parent=1 // pred_check_branch
      %24 = sbr.rel (0) target = $region21
    $region20: #{fcvpnn_forward.1} parent=1 // pred_region
      _
    $region21: #{fcvpnn_forward.1} parent=1 // pred_fallthru
      _
    // Predicated region
    $region22: #{fcvpnn_forward.1} parent=1 // pred_check
      _
    $region23: #{fcvpnn_forward.1} parent=1 // pred_check_branch
      %26 = sbr.rel (0) target = $region25
    $region24: #{fcvpnn_forward.1} parent=1 // pred_region
      _
    $region25: #{fcvpnn_forward.1} parent=1 // pred_fallthru
      _
    %v27 = vld [vmem:[%s0] sm:$0x3]
    %v28 = vld [vmem:[%s1] sm:$0xff]
    %v29 = vld [vmem:[%s1 + $0x8] sm:$0xff]
    %vm30 = vcmask 130048
    %v32 = vsel %vm30, %v27, 0
    %34 = vmatprep.subr.mxu0 0.0
    %35 = vmatpush1.msra.mxu0 0.0
    %36 = vmatprep.subr.mxu0 0.0
    %37 = vmatpush1.msra.mxu0 0.0
    %38 = vmatprep.subr.mxu0 0.0
    %39 = vmatpush1.msra.mxu0 0.0
    %40 = vmatprep.subr.mxu0 0.0
    %41 = vmatpush1.msra.mxu0 0.0
    %42 = vmatprep.subr.mxu0 0.0
    %43 = vmatpush1.msra.mxu0 0.0
    %44 = vmatprep.subr.mxu0 0.0
    %45 = vmatpush1.msra.mxu0 0.0
    %46 = vmatprep.subr.mxu0 0.0
    %47 = vmatpush1.msra.mxu0 0.0
    %48 = vmatprep.subr.mxu0 0.0
    %49 = vmatpush1.msra.mxu0 0.0
    %50 = vmatprep.subr.mxu0 0.0
    %51 = vmatpush1.msra.mxu0 0.0
    %52 = vmatprep.subr.mxu0 0.0
    %53 = vmatpush1.msra.mxu0 0.0
    %54 = vmatprep.subr.mxu0 0.0
    %55 = vmatpush1.msra.mxu0 0.0
    %56 = vmatprep.subr.mxu0 0.0
    %57 = vmatpush1.msra.mxu0 0.0
    %58 = vmatprep.subr.mxu0 0.0
    %59 = vmatpush1.msra.mxu0 0.0
    %60 = vmatprep.subr.mxu0 0.0
    %61 = vmatpush1.msra.mxu0 0.0
    %62 = vmatprep.subr.mxu0 0.0
    %63 = vmatpush1.msra.mxu0 %v29
    %64 = vmatprep.subr.mxu0 0.0
    %65 = vmatpush1.msra.mxu0 %v28
    %66 = vmatprep.subr.mxu0 0.0
    %67 = vmatpush2.msra.mxu0 0.0
    %68 = vmatprep.subr.mxu0 0.0
    %69 = vmatpush2.msra.mxu0 0.0
    %70 = vmatprep.subr.mxu0 0.0
    %71 = vmatpush2.msra.mxu0 0.0
    %72 = vmatprep.subr.mxu0 0.0
    %73 = vmatpush2.msra.mxu0 0.0
    %74 = vmatprep.subr.mxu0 0.0
    %75 = vmatpush2.msra.mxu0 0.0
    %76 = vmatprep.subr.mxu0 0.0
    %77 = vmatpush2.msra.mxu0 0.0
    %78 = vmatprep.subr.mxu0 0.0
    %79 = vmatpush2.msra.mxu0 0.0
    %80 = vmatprep.subr.mxu0 0.0
    %81 = vmatpush2.msra.mxu0 0.0
    %82 = vmatprep.subr.mxu0 0.0
    %83 = vmatpush2.msra.mxu0 0.0
    %84 = vmatprep.subr.mxu0 0.0
    %85 = vmatpush2.msra.mxu0 0.0
    %86 = vmatprep.subr.mxu0 0.0
    %87 = vmatpush2.msra.mxu0 0.0
    %88 = vmatprep.subr.mxu0 0.0
    %89 = vmatpush2.msra.mxu0 0.0
    %90 = vmatprep.subr.mxu0 0.0
    %91 = vmatpush2.msra.mxu0 0.0
    %92 = vmatprep.subr.mxu0 0.0
    %93 = vmatpush2.msra.mxu0 0.0
    %94 = vmatprep.subr.mxu0 0.0
    %95 = vmatpush2.msra.mxu0 0.0
    %96 = vmatprep.subr.mxu0 0.0
    %97 = vmatpush2.msra.mxu0 0.0
    %98 = vmatprep.mubr.f32.mxu0 0.0
    %99 = vmatmul.mubr.f32.gmra.mxu0 %v32
    %v100 = vpop.f32.mrf.mxu0
    %v101 = vadd.f32 0.0, %v100
    %v102 = vpop.f32.mrf.mxu0
    %103 = vdwg.mxu0
    %v104 = vld [vmem:[%s2] sm:$0xff]
    %v105 = vld [vmem:[%s2 + $0x8] sm:$0xff]
    %v106 = vld [vmem:[%s2 + $0x10] sm:$0xff]
    %v107 = vld [vmem:[%s3] sm:$0x1]
    %v109 = vlaneseq
    %v110 = vshrl.u32 %v109, 7
    %v111 = vsub.s32 0, %v110
    %v112 = vrot.slane %v107, %v111
    %vm114 = vcmask 195584
    %v116 = vsel %vm114, %v101, 0
    %118 = vmatprep.subr.mxu0 0.0
    %119 = vmatpush1.msra.mxu0 0.0
    %120 = vmatprep.subr.mxu0 0.0
    %121 = vmatpush1.msra.mxu0 0.0
    %122 = vmatprep.subr.mxu0 0.0
    %123 = vmatpush1.msra.mxu0 0.0
    %124 = vmatprep.subr.mxu0 0.0
    %125 = vmatpush1.msra.mxu0 0.0
    %126 = vmatprep.subr.mxu0 0.0
    %127 = vmatpush1.msra.mxu0 0.0
    %128 = vmatprep.subr.mxu0 0.0
    %129 = vmatpush1.msra.mxu0 0.0
    %130 = vmatprep.subr.mxu0 0.0
    %131 = vmatpush1.msra.mxu0 0.0
    %132 = vmatprep.subr.mxu0 0.0
    %133 = vmatpush1.msra.mxu0 0.0
    %134 = vmatprep.subr.mxu0 0.0
    %135 = vmatpush1.msra.mxu0 0.0
    %136 = vmatprep.subr.mxu0 0.0
    %137 = vmatpush1.msra.mxu0 0.0
    %138 = vmatprep.subr.mxu0 0.0
    %139 = vmatpush1.msra.mxu0 0.0
    %140 = vmatprep.subr.mxu0 0.0
    %141 = vmatpush1.msra.mxu0 0.0
    %142 = vmatprep.subr.mxu0 0.0
    %143 = vmatpush1.msra.mxu0 0.0
    %144 = vmatprep.subr.mxu0 0.0
    %145 = vmatpush1.msra.mxu0 %v106
    %146 = vmatprep.subr.mxu0 0.0
    %147 = vmatpush1.msra.mxu0 %v105
    %148 = vmatprep.subr.mxu0 0.0
    %149 = vmatpush1.msra.mxu0 %v104
    %150 = vmatprep.subr.mxu0 0.0
    %151 = vmatpush2.msra.mxu0 0.0
    %152 = vmatprep.subr.mxu0 0.0
    %153 = vmatpush2.msra.mxu0 0.0
    %154 = vmatprep.subr.mxu0 0.0
    %155 = vmatpush2.msra.mxu0 0.0
    %156 = vmatprep.subr.mxu0 0.0
    %157 = vmatpush2.msra.mxu0 0.0
    %158 = vmatprep.subr.mxu0 0.0
    %159 = vmatpush2.msra.mxu0 0.0
    %160 = vmatprep.subr.mxu0 0.0
    %161 = vmatpush2.msra.mxu0 0.0
    %162 = vmatprep.subr.mxu0 0.0
    %163 = vmatpush2.msra.mxu0 0.0
    %164 = vmatprep.subr.mxu0 0.0
    %165 = vmatpush2.msra.mxu0 0.0
    %166 = vmatprep.subr.mxu0 0.0
    %167 = vmatpush2.msra.mxu0 0.0
    %168 = vmatprep.subr.mxu0 0.0
    %169 = vmatpush2.msra.mxu0 0.0
    %170 = vmatprep.subr.mxu0 0.0
    %171 = vmatpush2.msra.mxu0 0.0
    %172 = vmatprep.subr.mxu0 0.0
    %173 = vmatpush2.msra.mxu0 0.0
    %174 = vmatprep.subr.mxu0 0.0
    %175 = vmatpush2.msra.mxu0 0.0
    %176 = vmatprep.subr.mxu0 0.0
    %177 = vmatpush2.msra.mxu0 0.0
    %178 = vmatprep.subr.mxu0 0.0
    %179 = vmatpush2.msra.mxu0 0.0
    %180 = vmatprep.subr.mxu0 0.0
    %181 = vmatpush2.msra.mxu0 0.0
    %182 = vmatprep.mubr.f32.mxu0 0.0
    %183 = vmatmul.mubr.f32.gmra.mxu0 %v116
    %v184 = vpop.f32.mrf.mxu0
    %v185 = vadd.f32 %v112, %v184
    %v186 = vpop.f32.mrf.mxu0
    %187 = vdwg.mxu0
    %v188 = vmax.f32 %v185, 0.0
    %v189 = vld [vmem:[%s4] sm:$0xff]
    %v190 = vld [vmem:[%s4 + $0x8] sm:$0xff]
    %v191 = vld [vmem:[%s4 + $0x10] sm:$0xff]
    %v192 = vld [vmem:[%s4 + $0x18] sm:$0xff]
    %v193 = vld [vmem:[%s4 + $0x20] sm:$0xff]
    %v194 = vld [vmem:[%s4 + $0x28] sm:$0xff]
    %v195 = vld [vmem:[%s5] sm:$0x1]
    %v197 = vlaneseq
    %v198 = vshrl.u32 %v197, 7
    %v199 = vsub.s32 0, %v198
    %v200 = vrot.slane %v195, %v199
    %vm202 = vcmask 392192
    %v204 = vsel %vm202, %v188, 0
    %206 = vmatprep.subr.mxu0 0.0
    %207 = vmatpush1.msra.mxu0 0.0
    %208 = vmatprep.subr.mxu0 0.0
    %209 = vmatpush1.msra.mxu0 0.0
    %210 = vmatprep.subr.mxu0 0.0
    %211 = vmatpush1.msra.mxu0 0.0
    %212 = vmatprep.subr.mxu0 0.0
    %213 = vmatpush1.msra.mxu0 0.0
    %214 = vmatprep.subr.mxu0 0.0
    %215 = vmatpush1.msra.mxu0 0.0
    %216 = vmatprep.subr.mxu0 0.0
    %217 = vmatpush1.msra.mxu0 0.0
    %218 = vmatprep.subr.mxu0 0.0
    %219 = vmatpush1.msra.mxu0 0.0
    %220 = vmatprep.subr.mxu0 0.0
    %221 = vmatpush1.msra.mxu0 0.0
    %222 = vmatprep.subr.mxu0 0.0
    %223 = vmatpush1.msra.mxu0 0.0
    %224 = vmatprep.subr.mxu0 0.0
    %225 = vmatpush1.msra.mxu0 0.0
    %226 = vmatprep.subr.mxu0 0.0
    %227 = vmatpush1.msra.mxu0 %v194
    %228 = vmatprep.subr.mxu0 0.0
    %229 = vmatpush1.msra.mxu0 %v193
    %230 = vmatprep.subr.mxu0 0.0
    %231 = vmatpush1.msra.mxu0 %v192
    %232 = vmatprep.subr.mxu0 0.0
    %233 = vmatpush1.msra.mxu0 %v191
    %234 = vmatprep.subr.mxu0 0.0
    %235 = vmatpush1.msra.mxu0 %v190
    %236 = vmatprep.subr.mxu0 0.0
    %237 = vmatpush1.msra.mxu0 %v189
    %238 = vmatprep.subr.mxu0 0.0
    %239 = vmatpush2.msra.mxu0 0.0
    %240 = vmatprep.subr.mxu0 0.0
    %241 = vmatpush2.msra.mxu0 0.0
    %242 = vmatprep.subr.mxu0 0.0
    %243 = vmatpush2.msra.mxu0 0.0
    %244 = vmatprep.subr.mxu0 0.0
    %245 = vmatpush2.msra.mxu0 0.0
    %246 = vmatprep.subr.mxu0 0.0
    %247 = vmatpush2.msra.mxu0 0.0
    %248 = vmatprep.subr.mxu0 0.0
    %249 = vmatpush2.msra.mxu0 0.0
    %250 = vmatprep.subr.mxu0 0.0
    %251 = vmatpush2.msra.mxu0 0.0
    %252 = vmatprep.subr.mxu0 0.0
    %253 = vmatpush2.msra.mxu0 0.0
    %254 = vmatprep.subr.mxu0 0.0
    %255 = vmatpush2.msra.mxu0 0.0
    %256 = vmatprep.subr.mxu0 0.0
    %257 = vmatpush2.msra.mxu0 0.0
    %258 = vmatprep.subr.mxu0 0.0
    %259 = vmatpush2.msra.mxu0 0.0
    %260 = vmatprep.subr.mxu0 0.0
    %261 = vmatpush2.msra.mxu0 0.0
    %262 = vmatprep.subr.mxu0 0.0
    %263 = vmatpush2.msra.mxu0 0.0
    %264 = vmatprep.subr.mxu0 0.0
    %265 = vmatpush2.msra.mxu0 0.0
    %266 = vmatprep.subr.mxu0 0.0
    %267 = vmatpush2.msra.mxu0 0.0
    %268 = vmatprep.subr.mxu0 0.0
    %269 = vmatpush2.msra.mxu0 0.0
    %270 = vmatprep.mubr.f32.mxu0 0.0
    %271 = vmatmul.mubr.f32.gmra.mxu0 %v204
    %v272 = vpop.f32.mrf.mxu0
    %v273 = vadd.f32 %v200, %v272
    %v274 = vpop.f32.mrf.mxu0
    %275 = vdwg.mxu0
    %v276 = vadd.f32 %v101, %v273
    %vm277 = vcmask 189440
    %278 = vst.msk [vmem:[#allocation2] sm:$0x3] %vm277, %v276
    %279 = vst.msk [vmem:[#allocation4] sm:$0x3] %vm277, %v101
    // Predicated region
    $region26: #{fcvpnn_forward.1} parent=1 // pred_check
      _
    $region27: #{fcvpnn_forward.1} parent=1 // pred_check_branch
      %281 = sbr.rel (0) target = $region29
    $region28: #{fcvpnn_forward.1} parent=1 // pred_region
      %s283 = ssub.s32 32, 32
      %284 = vsyncadd [#allocation3], %s283
      %s286 = sshll.u32 [#allocation2], 4
      %s287 = int_to_ptr.vmem [resolvable:$true] %s286
      %289 = dma.vmem_to_hbm [thread:$0]  %s287, 32, %s6, [#allocation3]
    $region29: #{fcvpnn_forward.1} parent=1 // pred_fallthru
      _
    // Predicated region
    $region30: #{fcvpnn_forward.1} parent=1 // pred_check
      _
    $region31: #{fcvpnn_forward.1} parent=1 // pred_check_branch
      %291 = sbr.rel (0) target = $region33
    $region32: #{fcvpnn_forward.1} parent=1 // pred_region
      %s293 = ssub.s32 32, 32
      %294 = vsyncadd [#allocation5], %s293
      %s296 = sshll.u32 [#allocation4], 4
      %s297 = int_to_ptr.vmem [resolvable:$true] %s296
      %299 = dma.vmem_to_hbm [thread:$0]  %s297, 32, %s7, [#allocation5]
    $region33: #{fcvpnn_forward.1} parent=1 // pred_fallthru
      _
    // Predicated region
    $region34: #{fcvpnn_forward.1} parent=1 // pred_check
      _
    $region35: #{fcvpnn_forward.1} parent=1 // pred_check_branch
      %301 = sbr.rel (0) target = $region37
    $region36: #{fcvpnn_forward.1} parent=1 // pred_region
      %302 = dma.done [#allocation3], 32
    $region37: #{fcvpnn_forward.1} parent=1 // pred_fallthru
      _
    // Predicated region
    $region38: #{fcvpnn_forward.1} parent=1 // pred_check
      _
    $region39: #{fcvpnn_forward.1} parent=1 // pred_check_branch
      %304 = sbr.rel (0) target = $region41
    $region40: #{fcvpnn_forward.1} parent=1 // pred_region
      %305 = dma.done [#allocation5], 32
    $region41: #{fcvpnn_forward.1} parent=1 // pred_fallthru
      _
    %306 = vsyncpa [#allocation3], 1
    %307 = vsyncpa [#allocation5], 1

</llo_original>
